<compile_context>
chip_gen: v7x
topology: tpu7x:2x2x1
jax: 0.10.0
libtpu: 0.0.40
codegen_flags: <defaults>
</compile_context>

<pallas_src>
import jax
import jax.numpy as jnp
from jax.experimental import pallas as pl
from jax.experimental.pallas import tpu as pltpu

D_IN, D1, D2, D3, D4, D_OUT = 768, 1024, 128, 64, 16, 1
LANE = 128


def _round_up(x, m):
    return (x + m - 1) // m * m


def _choose_tile_b(B, tile_b):
    """Round the batch tile to a lane multiple, cap by batch, keep >=2 grid steps."""
    tile_b = max(LANE, _round_up(tile_b, LANE))
    tile_b = min(tile_b, _round_up(B, LANE))
    # v7x megacore: ensure the ("parallel",) batch grid has at least 2 steps so
    # both TensorCores get work; no-op for single-TC v5e/v6e and for tiny batches.
    if B > LANE and pl.cdiv(B, tile_b) < 2:
        tile_b = max(LANE, _round_up(pl.cdiv(B, 2), LANE))
    return tile_b


def mlp_kernel(x_ref, w_ref, b_ref, o_ref):
    # x_ref: (tile_b, 768) f32  -- streamed from HBM, no host-side cast/pad.
    # w_ref: (1, 768)      f32  -- fully folded network column (as a row).
    # b_ref: (1, 1)        f32  -- fully folded bias.
    # o_ref: (1, tile_b)   f32  -- lane-dense output (batch along lanes).
    #
    # Single fused GEMV.  Contracting over the 768 feature dim with the batch
    # dim landing on lanes gives the lane-dense result directly (full-width
    # unmasked stores) without any in-kernel transpose/reshape.
    out = jnp.einsum(
        "od,bd->ob", w_ref[...], x_ref[...],
        preferred_element_type=jnp.float32,
    )
    o_ref[...] = (out + b_ref[...]).astype(o_ref.dtype)


def prepare_inference_params(params):
    """Fold the entire all-linear network (dropout = identity at eval).

    Returns (w_row, b_all):
      w_row: (1, 768) f32   -- (W1 W2 W3 W4 W5)^T
      b_all: (1, 1)   f32
    """
    (w, b) = params[0]
    w_all = w.astype(jnp.float32)          # (768, 1024)
    b_all = b.astype(jnp.float32)          # (1, 1024)
    for (wi, bi) in params[1:]:
        w_all = w_all @ wi                 # ... -> (768, 1)
        b_all = b_all @ wi + bi            # ... -> (1, 1)
    return w_all.T, b_all                  # (1, 768), (1, 1)


def mlp_forward(x, params, *, tile_b=1024):
    """x: [B, 768] float32 -> [B, 1] float32 (eval-mode MLP forward)."""
    B = x.shape[0]
    w_row, b_all = prepare_inference_params(params)

    tile_b = _choose_tile_b(B, tile_b)
    grid = (pl.cdiv(B, tile_b),)
    bp = grid[0] * tile_b                  # padded batch covered by the grid

    in_specs = [
        # x tile, pipelined over the batch grid; last block may be partial
        # (undefined padded rows only contaminate their own discarded outputs).
        pl.BlockSpec((tile_b, D_IN), lambda i: (i, 0)),
        # Folded weights / bias: constant block index -> DMA'd into VMEM once.
        pl.BlockSpec(w_row.shape, lambda i: (0, 0)),
        pl.BlockSpec(b_all.shape, lambda i: (0, 0)),
    ]
    out_spec = pl.BlockSpec((1, tile_b), lambda i: (0, i))

    out = pl.pallas_call(
        mlp_kernel,
        out_shape=jax.ShapeDtypeStruct((1, bp), jnp.float32),
        grid_spec=pltpu.PrefetchScalarGridSpec(
            num_scalar_prefetch=0,
            grid=grid,
            in_specs=in_specs,
            out_specs=out_spec,
        ),
        compiler_params=pltpu.CompilerParams(
            dimension_semantics=("parallel",),       # shard batch grid across TCs (v7x)
            vmem_limit_bytes=48 * 1024 * 1024,       # headroom for tile_b up to ~4096;
                                                     # safe on v7x's 64 MiB physical VMEM
        ),
    )(x.astype(jnp.float32), w_row, b_all)

    # Back to the module's [B, 1] layout; drop padded lanes.
    return out[0, :B].reshape(B, 1)


def init_params(key):
    """Deterministic synthetic params, torch.nn.Linear-like init.
    Weight layout: (in_features, out_features); biases kept 2-D (1, out)."""
    dims = [(D_IN, D1), (D1, D2), (D2, D3), (D3, D4), (D4, D_OUT)]
    params = []
    for (din, dout) in dims:
        key, kw, kb = jax.random.split(key, 3)
        scale = 1.0 / jnp.sqrt(jnp.float32(din))
        w = jax.random.uniform(kw, (din, dout), jnp.float32, -scale, scale)
        b = jax.random.uniform(kb, (1, dout), jnp.float32, -scale, scale)
        params.append((w, b))
    return params


def mlp_reference(x, params):
    """Pure f32 layer-by-layer reference (dropout = identity at eval)."""
    out = x
    for (w, b) in params:
        out = out @ w + b
    return out


if __name__ == "__main__":
    key = jax.random.PRNGKey(0)
    kx, kp = jax.random.split(key)

    B = 20                                   # not a multiple of the tile: exercises partial block
    x = jax.random.normal(kx, (B, D_IN), jnp.float32)
    params = init_params(kp)

    out = mlp_forward(x, params)
    out = jax.block_until_ready(out)

    ref = mlp_reference(x, params)
    assert out.shape == (B, D_OUT), out.shape
    err = float(jnp.max(jnp.abs(out - ref)))
    assert jnp.allclose(out, ref, atol=1e-2, rtol=1e-2), err

    print("KERNEL_OK")
</pallas_src>

<mosaic_0001>
module attributes {stable_mosaic.version = 11 : i64} {
  func.func @mlp_kernel(%arg0: i32, %arg1: memref<128x768xf32, #tpu.memory_space<vmem>>, %arg2: memref<1x768xf32, #tpu.memory_space<vmem>>, %arg3: memref<1x1xf32, #tpu.memory_space<vmem>>, %arg4: memref<1x128xf32, #tpu.memory_space<vmem>>) attributes {dimension_semantics = [#tpu.dimension_semantics<parallel>], iteration_bounds = array<i64: 1>, scalar_prefetch = 0 : i64, scratch_operands = 0 : i64, tpu.core_type = #tpu.core_type<tc>, window_params = [{transform_indices = @transform_0, window_bounds = array<i64: 128, 768>}, {pipeline_mode = #tpu.pipeline_mode<synchronous>, transform_indices = @transform_1, window_bounds = array<i64: 1, 768>}, {pipeline_mode = #tpu.pipeline_mode<synchronous>, transform_indices = @transform_2, window_bounds = array<i64: 1, 1>}, {transform_indices = @transform_3, window_bounds = array<i64: 1, 128>}]} {
    %c0 = arith.constant 0 : index
    %c0_0 = arith.constant 0 : index
    %0 = vector.load %arg2[%c0, %c0_0] : memref<1x768xf32, #tpu.memory_space<vmem>>, vector<1x768xf32>
    %c0_1 = arith.constant 0 : index
    %c0_2 = arith.constant 0 : index
    %1 = vector.load %arg1[%c0_1, %c0_2] : memref<128x768xf32, #tpu.memory_space<vmem>>, vector<128x768xf32>
    "tpu.trace_start"() <{level = 10 : i32, message = "od,bd->ob"}> : () -> ()
    %cst = arith.constant dense<0.000000e+00> : vector<1x128xf32>
    %2 = tpu.matmul %0, %1, %cst {dimension_numbers = #tpu.dot_dimension_numbers<[1], [1], [0], [0], [0, 0, 1, 0], [], []>} : vector<1x768xf32>, vector<128x768xf32>, vector<1x128xf32> -> vector<1x128xf32>
    "tpu.trace_stop"() : () -> ()
    %c0_3 = arith.constant 0 : index
    %c0_4 = arith.constant 0 : index
    %3 = vector.load %arg3[%c0_3, %c0_4] : memref<1x1xf32, #tpu.memory_space<vmem>>, vector<1x1xf32>
    %4 = vector.broadcast %3 : vector<1x1xf32> to vector<1x128xf32>
    %5 = arith.addf %2, %4 : vector<1x128xf32>
    %c0_5 = arith.constant 0 : index
    %c0_6 = arith.constant 0 : index
    %6 = vector.load %arg4[%c0_5, %c0_6] : memref<1x128xf32, #tpu.memory_space<vmem>>, vector<1x128xf32>
    tpu.vector_store %arg4[%c0_5, %c0_6], %5 {strides = array<i32>} : memref<1x128xf32, #tpu.memory_space<vmem>>, vector<1x128xf32>,
    return
  }
  func.func @transform_0(%arg0: i32) -> (i32, i32) {
    %c0_i32 = arith.constant 0 : i32
    %c0_i32_0 = arith.constant 0 : i32
    return %arg0, %c0_i32 : i32, i32
  }
  func.func @transform_1(%arg0: i32) -> (i32, i32) {
    %c0_i32 = arith.constant 0 : i32
    %c0_i32_0 = arith.constant 0 : i32
    %c0_i32_1 = arith.constant 0 : i32
    return %c0_i32, %c0_i32_0 : i32, i32
  }
  func.func @transform_2(%arg0: i32) -> (i32, i32) {
    %c0_i32 = arith.constant 0 : i32
    %c0_i32_0 = arith.constant 0 : i32
    %c0_i32_1 = arith.constant 0 : i32
    return %c0_i32, %c0_i32_0 : i32, i32
  }
  func.func @transform_3(%arg0: i32) -> (i32, i32) {
    %c0_i32 = arith.constant 0 : i32
    %c0_i32_0 = arith.constant 0 : i32
    return %c0_i32, %arg0 : i32, i32
  }
}

</mosaic_0001>

<llo_original>
// kernel: tpu_custom_call.1
$region0: #{tpu_custom_call.1}
  #allocation0 [shape = 'u32[]', space=smem, size = 0x4, offset = 0x4, fixed_abs, tag = 'smem constant byte address 0x4 - core index']
  #allocation1 [shape = 'u32[144,128]{1,0:T(1,128)}', space=vmem, size = 0x12000, scoped, tag = 'internal scratch']
  #allocation2 [shape = 'f32[1,1]{1,0:T(1,128)S(1)}', space=vmem, size = 0x200, scoped, tag = 'scoped memory for tpu_custom_call.1']
  %s0 = inlined_call_operand.hbm [shape: f32[20,768], index: 0, kind: input, shape index: {}]
  %s1 = inlined_call_operand.vmem [shape: f32[1,768], index: 1, kind: input, shape index: {}]
  %s2 = inlined_call_operand.<no memory space> [shape: f32[1,1], index: 2, kind: input, shape index: {}]
  %s3 = inlined_call_operand.hbm [shape: f32[1,128], index: 3, kind: output, shape index: {}]
  %s4 = sld [smem:[#allocation0]]
  $region26: #{tpu_custom_call.1} parent=0
    _
  %s6 = ssub.s32 1, %s4
  %s7 = scalar_select 0, %s6, %s4
  %v8 = vstv %s2
  %9 = vst [vmem:[#allocation2] sm:$0x1] %v8
  $region1: #{tpu_custom_call.1} parent=0
    #allocation3 [shape = 'u8[393216]{0}', space=vmem, size = 0x60000, scoped, tag = 'input window, operand 0, single buffered']
    #allocation4 [shape = 's32[1]{0}', space=sflag, size = 0x4, scoped, tag = 'scoped memory for tpu_custom_call.1']
    #allocation5 [shape = 's32[1]{0}', space=sflag, size = 0x4, scoped, tag = 'scoped memory for tpu_custom_call.1']
    #allocation6 [shape = 'u8[512]{0}', space=vmem, size = 0x400, scoped, tag = 'output window, operand 0, single buffered']
    %10 = vsyncpa [#allocation4], 0
    %11 = vsyncpa [#allocation5], 0
    // Predicated region
    $region2: #{tpu_custom_call.1} parent=1 // pred_check
      _
    $region3: #{tpu_custom_call.1} parent=1 // pred_check_branch
      %13 = sbr.rel (0) target = $region5
    $region4: #{tpu_custom_call.1} parent=1 // pred_region
      %s15 = ssub.s32 12288, 2304
      %16 = vsyncadd [#allocation4], %s15
      %s17 = sshll.u32 [#allocation3], 4
      %s18 = int_to_ptr.vmem [resolvable:$true] %s17
      %23 = dma.hbm_to_vmem [thread:$0]  %s0, 2304, %s18, [#allocation4], 768, 768, 48
    $region5: #{tpu_custom_call.1} parent=1 // pred_fallthru
      _
    // Predicated region
    $region6: #{tpu_custom_call.1} parent=1 // pred_check
      _
    $region7: #{tpu_custom_call.1} parent=1 // pred_check_branch
      %25 = sbr.rel (0) target = $region9
    $region8: #{tpu_custom_call.1} parent=1 // pred_region
      _
    $region9: #{tpu_custom_call.1} parent=1 // pred_fallthru
      _
    // Predicated region
    $region10: #{tpu_custom_call.1} parent=1 // pred_check
      _
    $region11: #{tpu_custom_call.1} parent=1 // pred_check_branch
      %27 = sbr.rel (0) target = $region13
    $region12: #{tpu_custom_call.1} parent=1 // pred_region
      _
    $region13: #{tpu_custom_call.1} parent=1 // pred_fallthru
      _
    // Predicated region
    $region14: #{tpu_custom_call.1} parent=1 // pred_check
      _
    $region15: #{tpu_custom_call.1} parent=1 // pred_check_branch
      %29 = sbr.rel (0) target = $region17
    $region16: #{tpu_custom_call.1} parent=1 // pred_region
      %30 = dma.done [#allocation4], 12288
    $region17: #{tpu_custom_call.1} parent=1 // pred_fallthru
      _
    %v31 = vld [vmem:[%s1] sm:$0x3f]
    %v32 = vld [vmem:[#allocation3] sm:$0xff]
    %v33 = vld [vmem:[#allocation3 + $0x8] sm:$0xff]
    %v34 = vld [vmem:[#allocation3 + $0x10] sm:$0xff]
    %v35 = vld [vmem:[#allocation3 + $0x18] sm:$0xff]
    %v36 = vld [vmem:[#allocation3 + $0x20] sm:$0xff]
    %v37 = vld [vmem:[#allocation3 + $0x28] sm:$0xff]
    %v38 = vld [vmem:[#allocation3 + $0x30] sm:$0xff]
    %v39 = vld [vmem:[#allocation3 + $0x38] sm:$0xff]
    %v40 = vld [vmem:[#allocation3 + $0x40] sm:$0xff]
    %v41 = vld [vmem:[#allocation3 + $0x48] sm:$0xff]
    %v42 = vld [vmem:[#allocation3 + $0x50] sm:$0xff]
    %v43 = vld [vmem:[#allocation3 + $0x58] sm:$0xff]
    %v44 = vld [vmem:[#allocation3 + $0x60] sm:$0xff]
    %v45 = vld [vmem:[#allocation3 + $0x68] sm:$0xff]
    %v46 = vld [vmem:[#allocation3 + $0x70] sm:$0xff]
    %v47 = vld [vmem:[#allocation3 + $0x78] sm:$0xff]
    %v48 = vld [vmem:[#allocation3 + $0x80] sm:$0xff]
    %v49 = vld [vmem:[#allocation3 + $0x88] sm:$0xff]
    %v50 = vld [vmem:[#allocation3 + $0x90] sm:$0xff]
    %v51 = vld [vmem:[#allocation3 + $0x98] sm:$0xff]
    %v52 = vld [vmem:[#allocation3 + $0xa0] sm:$0xff]
    %v53 = vld [vmem:[#allocation3 + $0xa8] sm:$0xff]
    %v54 = vld [vmem:[#allocation3 + $0xb0] sm:$0xff]
    %v55 = vld [vmem:[#allocation3 + $0xb8] sm:$0xff]
    %v56 = vld [vmem:[#allocation3 + $0xc0] sm:$0xff]
    %v57 = vld [vmem:[#allocation3 + $0xc8] sm:$0xff]
    %v58 = vld [vmem:[#allocation3 + $0xd0] sm:$0xff]
    %v59 = vld [vmem:[#allocation3 + $0xd8] sm:$0xff]
    %v60 = vld [vmem:[#allocation3 + $0xe0] sm:$0xff]
    %v61 = vld [vmem:[#allocation3 + $0xe8] sm:$0xff]
    %v62 = vld [vmem:[#allocation3 + $0xf0] sm:$0xff]
    %v63 = vld [vmem:[#allocation3 + $0xf8] sm:$0xff]
    %v64 = vld [vmem:[#allocation3 + $0x100] sm:$0xff]
    %v65 = vld [vmem:[#allocation3 + $0x108] sm:$0xff]
    %v66 = vld [vmem:[#allocation3 + $0x110] sm:$0xff]
    %v67 = vld [vmem:[#allocation3 + $0x118] sm:$0xff]
    %v68 = vld [vmem:[#allocation3 + $0x120] sm:$0xff]
    %v69 = vld [vmem:[#allocation3 + $0x128] sm:$0xff]
    %v70 = vld [vmem:[#allocation3 + $0x130] sm:$0xff]
    %v71 = vld [vmem:[#allocation3 + $0x138] sm:$0xff]
    %v72 = vld [vmem:[#allocation3 + $0x140] sm:$0xff]
    %v73 = vld [vmem:[#allocation3 + $0x148] sm:$0xff]
    %v74 = vld [vmem:[#allocation3 + $0x150] sm:$0xff]
    %v75 = vld [vmem:[#allocation3 + $0x158] sm:$0xff]
    %v76 = vld [vmem:[#allocation3 + $0x160] sm:$0xff]
    %v77 = vld [vmem:[#allocation3 + $0x168] sm:$0xff]
    %v78 = vld [vmem:[#allocation3 + $0x170] sm:$0xff]
    %v79 = vld [vmem:[#allocation3 + $0x178] sm:$0xff]
    %v80 = vld [vmem:[#allocation3 + $0x180] sm:$0xff]
    %v81 = vld [vmem:[#allocation3 + $0x188] sm:$0xff]
    %v82 = vld [vmem:[#allocation3 + $0x190] sm:$0xff]
    %v83 = vld [vmem:[#allocation3 + $0x198] sm:$0xff]
    %v84 = vld [vmem:[#allocation3 + $0x1a0] sm:$0xff]
    %v85 = vld [vmem:[#allocation3 + $0x1a8] sm:$0xff]
    %v86 = vld [vmem:[#allocation3 + $0x1b0] sm:$0xff]
    %v87 = vld [vmem:[#allocation3 + $0x1b8] sm:$0xff]
    %v88 = vld [vmem:[#allocation3 + $0x1c0] sm:$0xff]
    %v89 = vld [vmem:[#allocation3 + $0x1c8] sm:$0xff]
    %v90 = vld [vmem:[#allocation3 + $0x1d0] sm:$0xff]
    %v91 = vld [vmem:[#allocation3 + $0x1d8] sm:$0xff]
    %v92 = vld [vmem:[#allocation3 + $0x1e0] sm:$0xff]
    %v93 = vld [vmem:[#allocation3 + $0x1e8] sm:$0xff]
    %v94 = vld [vmem:[#allocation3 + $0x1f0] sm:$0xff]
    %v95 = vld [vmem:[#allocation3 + $0x1f8] sm:$0xff]
    %v96 = vld [vmem:[#allocation3 + $0x200] sm:$0xff]
    %v97 = vld [vmem:[#allocation3 + $0x208] sm:$0xff]
    %v98 = vld [vmem:[#allocation3 + $0x210] sm:$0xff]
    %v99 = vld [vmem:[#allocation3 + $0x218] sm:$0xff]
    %v100 = vld [vmem:[#allocation3 + $0x220] sm:$0xff]
    %v101 = vld [vmem:[#allocation3 + $0x228] sm:$0xff]
    %v102 = vld [vmem:[#allocation3 + $0x230] sm:$0xff]
    %v103 = vld [vmem:[#allocation3 + $0x238] sm:$0xff]
    %v104 = vld [vmem:[#allocation3 + $0x240] sm:$0xff]
    %v105 = vld [vmem:[#allocation3 + $0x248] sm:$0xff]
    %v106 = vld [vmem:[#allocation3 + $0x250] sm:$0xff]
    %v107 = vld [vmem:[#allocation3 + $0x258] sm:$0xff]
    %v108 = vld [vmem:[#allocation3 + $0x260] sm:$0xff]
    %v109 = vld [vmem:[#allocation3 + $0x268] sm:$0xff]
    %v110 = vld [vmem:[#allocation3 + $0x270] sm:$0xff]
    %v111 = vld [vmem:[#allocation3 + $0x278] sm:$0xff]
    %v112 = vld [vmem:[#allocation3 + $0x280] sm:$0xff]
    %v113 = vld [vmem:[#allocation3 + $0x288] sm:$0xff]
    %v114 = vld [vmem:[#allocation3 + $0x290] sm:$0xff]
    %v115 = vld [vmem:[#allocation3 + $0x298] sm:$0xff]
    %v116 = vld [vmem:[#allocation3 + $0x2a0] sm:$0xff]
    %v117 = vld [vmem:[#allocation3 + $0x2a8] sm:$0xff]
    %v118 = vld [vmem:[#allocation3 + $0x2b0] sm:$0xff]
    %v119 = vld [vmem:[#allocation3 + $0x2b8] sm:$0xff]
    %v120 = vld [vmem:[#allocation3 + $0x2c0] sm:$0xff]
    %v121 = vld [vmem:[#allocation3 + $0x2c8] sm:$0xff]
    %v122 = vld [vmem:[#allocation3 + $0x2d0] sm:$0xff]
    %v123 = vld [vmem:[#allocation3 + $0x2d8] sm:$0xff]
    %v124 = vld [vmem:[#allocation3 + $0x2e0] sm:$0xff]
    %v125 = vld [vmem:[#allocation3 + $0x2e8] sm:$0xff]
    %v126 = vld [vmem:[#allocation3 + $0x2f0] sm:$0xff]
    %v127 = vld [vmem:[#allocation3 + $0x2f8] sm:$0xff]
    %v128 = vld [vmem:[#allocation2] sm:$0x1]
    %130 = vset.pattern.permute.xlu0 0
    %131 = vperm.xlu0 %130, %v128
    %v132 = vpop.permute.xlu0 %131
    %v134 = vlaneseq
    %v135 = vshrl.u32 %v134, 7
    %v136 = vsub.s32 0, %v135
    %v137 = vrot.slane %v132, %v136
    %v139 = vlaneseq
    %v140 = vshrl.u32 %v139, 7
    %v141 = vsub.s32 0, %v140
    %v142 = vrot.slane %v31, %v141
    %v143 = vlaneseq
    %v144 = vshrl.u32 %v143, 7
    %v145 = vsub.s32 1, %v144
    %v146 = vrot.slane %v31, %v145
    %v147 = vlaneseq
    %v148 = vshrl.u32 %v147, 7
    %v149 = vsub.s32 2, %v148
    %v150 = vrot.slane %v31, %v149
    %v151 = vlaneseq
    %v152 = vshrl.u32 %v151, 7
    %v153 = vsub.s32 3, %v152
    %v154 = vrot.slane %v31, %v153
    %v155 = vlaneseq
    %v156 = vshrl.u32 %v155, 7
    %v157 = vsub.s32 4, %v156
    %v158 = vrot.slane %v31, %v157
    %v159 = vlaneseq
    %v160 = vshrl.u32 %v159, 7
    %v161 = vsub.s32 5, %v160
    %v162 = vrot.slane %v31, %v161
    %169 = vmatprep.subr.mxu0 %v33
    %170 = vmatpush1.xpose.msra.mxu0 %v32
    %171 = vmatprep.subr.mxu0 %v39
    %172 = vmatpush1.xpose.msra.mxu0 %v38
    %173 = vmatprep.subr.mxu0 %v45
    %174 = vmatpush1.xpose.msra.mxu0 %v44
    %175 = vmatprep.subr.mxu0 %v51
    %176 = vmatpush1.xpose.msra.mxu0 %v50
    %177 = vmatprep.subr.mxu0 %v57
    %178 = vmatpush1.xpose.msra.mxu0 %v56
    %179 = vmatprep.subr.mxu0 %v63
    %180 = vmatpush1.xpose.msra.mxu0 %v62
    %181 = vmatprep.subr.mxu0 %v69
    %182 = vmatpush1.xpose.msra.mxu0 %v68
    %183 = vmatprep.subr.mxu0 %v75
    %184 = vmatpush1.xpose.msra.mxu0 %v74
    %185 = vmatprep.subr.mxu0 %v81
    %186 = vmatpush1.xpose.msra.mxu0 %v80
    %187 = vmatprep.subr.mxu0 %v87
    %188 = vmatpush1.xpose.msra.mxu0 %v86
    %189 = vmatprep.subr.mxu0 %v93
    %190 = vmatpush1.xpose.msra.mxu0 %v92
    %191 = vmatprep.subr.mxu0 %v99
    %192 = vmatpush1.xpose.msra.mxu0 %v98
    %193 = vmatprep.subr.mxu0 %v105
    %194 = vmatpush1.xpose.msra.mxu0 %v104
    %195 = vmatprep.subr.mxu0 %v111
    %196 = vmatpush1.xpose.msra.mxu0 %v110
    %197 = vmatprep.subr.mxu0 %v117
    %198 = vmatpush1.xpose.msra.mxu0 %v116
    %199 = vmatprep.subr.mxu0 %v123
    %200 = vmatpush1.xpose.msra.mxu0 %v122
    %201 = vmatprep.subr.mxu0 0.0
    %202 = vmatpush1.xpose.msra.mxu0 0.0
    %203 = vmatprep.subr.mxu0 0.0
    %204 = vmatpush1.xpose.msra.mxu0 0.0
    %205 = vmatprep.subr.mxu0 0.0
    %206 = vmatpush1.xpose.msra.mxu0 0.0
    %207 = vmatprep.subr.mxu0 0.0
    %208 = vmatpush1.xpose.msra.mxu0 0.0
    %209 = vmatprep.subr.mxu0 0.0
    %210 = vmatpush1.xpose.msra.mxu0 0.0
    %211 = vmatprep.subr.mxu0 0.0
    %212 = vmatpush1.xpose.msra.mxu0 0.0
    %213 = vmatprep.subr.mxu0 0.0
    %214 = vmatpush1.xpose.msra.mxu0 0.0
    %215 = vmatprep.subr.mxu0 0.0
    %216 = vmatpush1.xpose.msra.mxu0 0.0
    %217 = vmatprep.subr.mxu0 0.0
    %218 = vmatpush1.xpose.msra.mxu0 0.0
    %219 = vmatprep.subr.mxu0 0.0
    %220 = vmatpush1.xpose.msra.mxu0 0.0
    %221 = vmatprep.subr.mxu0 0.0
    %222 = vmatpush1.xpose.msra.mxu0 0.0
    %223 = vmatprep.subr.mxu0 0.0
    %224 = vmatpush1.xpose.msra.mxu0 0.0
    %225 = vmatprep.subr.mxu0 0.0
    %226 = vmatpush1.xpose.msra.mxu0 0.0
    %227 = vmatprep.subr.mxu0 0.0
    %228 = vmatpush1.xpose.msra.mxu0 0.0
    %229 = vmatprep.subr.mxu0 0.0
    %230 = vmatpush1.xpose.msra.mxu0 0.0
    %231 = vmatprep.subr.mxu0 0.0
    %232 = vmatpush1.xpose.msra.mxu0 0.0
    %233 = vmatprep.mubr.f32.mxu0 %v146
    %234 = vmatmul.mubr.f32.gmra.mrb[0].mxu0 %v142
    %v235 = vpop.f32.mrb[0].mxu0
    %v236 = vadd.f32 %v137, %v235
    %v237 = vpop.f32.mrb[0].mxu0
    %238 = vdwg.mxu0
    %239 = vmatprep.subr.mxu0 %v35
    %240 = vmatpush1.xpose.msra.mxu0 %v34
    %241 = vmatprep.subr.mxu0 %v41
    %242 = vmatpush1.xpose.msra.mxu0 %v40
    %243 = vmatprep.subr.mxu0 %v47
    %244 = vmatpush1.xpose.msra.mxu0 %v46
    %245 = vmatprep.subr.mxu0 %v53
    %246 = vmatpush1.xpose.msra.mxu0 %v52
    %247 = vmatprep.subr.mxu0 %v59
    %248 = vmatpush1.xpose.msra.mxu0 %v58
    %249 = vmatprep.subr.mxu0 %v65
    %250 = vmatpush1.xpose.msra.mxu0 %v64
    %251 = vmatprep.subr.mxu0 %v71
    %252 = vmatpush1.xpose.msra.mxu0 %v70
    %253 = vmatprep.subr.mxu0 %v77
    %254 = vmatpush1.xpose.msra.mxu0 %v76
    %255 = vmatprep.subr.mxu0 %v83
    %256 = vmatpush1.xpose.msra.mxu0 %v82
    %257 = vmatprep.subr.mxu0 %v89
    %258 = vmatpush1.xpose.msra.mxu0 %v88
    %259 = vmatprep.subr.mxu0 %v95
    %260 = vmatpush1.xpose.msra.mxu0 %v94
    %261 = vmatprep.subr.mxu0 %v101
    %262 = vmatpush1.xpose.msra.mxu0 %v100
    %263 = vmatprep.subr.mxu0 %v107
    %264 = vmatpush1.xpose.msra.mxu0 %v106
    %265 = vmatprep.subr.mxu0 %v113
    %266 = vmatpush1.xpose.msra.mxu0 %v112
    %267 = vmatprep.subr.mxu0 %v119
    %268 = vmatpush1.xpose.msra.mxu0 %v118
    %269 = vmatprep.subr.mxu0 %v125
    %270 = vmatpush1.xpose.msra.mxu0 %v124
    %271 = vmatprep.subr.mxu0 0.0
    %272 = vmatpush1.xpose.msra.mxu0 0.0
    %273 = vmatprep.subr.mxu0 0.0
    %274 = vmatpush1.xpose.msra.mxu0 0.0
    %275 = vmatprep.subr.mxu0 0.0
    %276 = vmatpush1.xpose.msra.mxu0 0.0
    %277 = vmatprep.subr.mxu0 0.0
    %278 = vmatpush1.xpose.msra.mxu0 0.0
    %279 = vmatprep.subr.mxu0 0.0
    %280 = vmatpush1.xpose.msra.mxu0 0.0
    %281 = vmatprep.subr.mxu0 0.0
    %282 = vmatpush1.xpose.msra.mxu0 0.0
    %283 = vmatprep.subr.mxu0 0.0
    %284 = vmatpush1.xpose.msra.mxu0 0.0
    %285 = vmatprep.subr.mxu0 0.0
    %286 = vmatpush1.xpose.msra.mxu0 0.0
    %287 = vmatprep.subr.mxu0 0.0
    %288 = vmatpush1.xpose.msra.mxu0 0.0
    %289 = vmatprep.subr.mxu0 0.0
    %290 = vmatpush1.xpose.msra.mxu0 0.0
    %291 = vmatprep.subr.mxu0 0.0
    %292 = vmatpush1.xpose.msra.mxu0 0.0
    %293 = vmatprep.subr.mxu0 0.0
    %294 = vmatpush1.xpose.msra.mxu0 0.0
    %295 = vmatprep.subr.mxu0 0.0
    %296 = vmatpush1.xpose.msra.mxu0 0.0
    %297 = vmatprep.subr.mxu0 0.0
    %298 = vmatpush1.xpose.msra.mxu0 0.0
    %299 = vmatprep.subr.mxu0 0.0
    %300 = vmatpush1.xpose.msra.mxu0 0.0
    %301 = vmatprep.subr.mxu0 0.0
    %302 = vmatpush1.xpose.msra.mxu0 0.0
    %303 = vmatprep.mubr.f32.mxu0 %v154
    %304 = vmatmul.mubr.f32.gmra.mrb[0].mxu0 %v150
    %v305 = vpop.f32.mrb[0].mxu0
    %v306 = vadd.f32 %v236, %v305
    %v307 = vpop.f32.mrb[0].mxu0
    %308 = vdwg.mxu0
    %309 = vmatprep.subr.mxu0 %v37
    %310 = vmatpush1.xpose.msra.mxu0 %v36
    %311 = vmatprep.subr.mxu0 %v43
    %312 = vmatpush1.xpose.msra.mxu0 %v42
    %313 = vmatprep.subr.mxu0 %v49
    %314 = vmatpush1.xpose.msra.mxu0 %v48
    %315 = vmatprep.subr.mxu0 %v55
    %316 = vmatpush1.xpose.msra.mxu0 %v54
    %317 = vmatprep.subr.mxu0 %v61
    %318 = vmatpush1.xpose.msra.mxu0 %v60
    %319 = vmatprep.subr.mxu0 %v67
    %320 = vmatpush1.xpose.msra.mxu0 %v66
    %321 = vmatprep.subr.mxu0 %v73
    %322 = vmatpush1.xpose.msra.mxu0 %v72
    %323 = vmatprep.subr.mxu0 %v79
    %324 = vmatpush1.xpose.msra.mxu0 %v78
    %325 = vmatprep.subr.mxu0 %v85
    %326 = vmatpush1.xpose.msra.mxu0 %v84
    %327 = vmatprep.subr.mxu0 %v91
    %328 = vmatpush1.xpose.msra.mxu0 %v90
    %329 = vmatprep.subr.mxu0 %v97
    %330 = vmatpush1.xpose.msra.mxu0 %v96
    %331 = vmatprep.subr.mxu0 %v103
    %332 = vmatpush1.xpose.msra.mxu0 %v102
    %333 = vmatprep.subr.mxu0 %v109
    %334 = vmatpush1.xpose.msra.mxu0 %v108
    %335 = vmatprep.subr.mxu0 %v115
    %336 = vmatpush1.xpose.msra.mxu0 %v114
    %337 = vmatprep.subr.mxu0 %v121
    %338 = vmatpush1.xpose.msra.mxu0 %v120
    %339 = vmatprep.subr.mxu0 %v127
    %340 = vmatpush1.xpose.msra.mxu0 %v126
    %341 = vmatprep.subr.mxu0 0.0
    %342 = vmatpush1.xpose.msra.mxu0 0.0
    %343 = vmatprep.subr.mxu0 0.0
    %344 = vmatpush1.xpose.msra.mxu0 0.0
    %345 = vmatprep.subr.mxu0 0.0
    %346 = vmatpush1.xpose.msra.mxu0 0.0
    %347 = vmatprep.subr.mxu0 0.0
    %348 = vmatpush1.xpose.msra.mxu0 0.0
    %349 = vmatprep.subr.mxu0 0.0
    %350 = vmatpush1.xpose.msra.mxu0 0.0
    %351 = vmatprep.subr.mxu0 0.0
    %352 = vmatpush1.xpose.msra.mxu0 0.0
    %353 = vmatprep.subr.mxu0 0.0
    %354 = vmatpush1.xpose.msra.mxu0 0.0
    %355 = vmatprep.subr.mxu0 0.0
    %356 = vmatpush1.xpose.msra.mxu0 0.0
    %357 = vmatprep.subr.mxu0 0.0
    %358 = vmatpush1.xpose.msra.mxu0 0.0
    %359 = vmatprep.subr.mxu0 0.0
    %360 = vmatpush1.xpose.msra.mxu0 0.0
    %361 = vmatprep.subr.mxu0 0.0
    %362 = vmatpush1.xpose.msra.mxu0 0.0
    %363 = vmatprep.subr.mxu0 0.0
    %364 = vmatpush1.xpose.msra.mxu0 0.0
    %365 = vmatprep.subr.mxu0 0.0
    %366 = vmatpush1.xpose.msra.mxu0 0.0
    %367 = vmatprep.subr.mxu0 0.0
    %368 = vmatpush1.xpose.msra.mxu0 0.0
    %369 = vmatprep.subr.mxu0 0.0
    %370 = vmatpush1.xpose.msra.mxu0 0.0
    %371 = vmatprep.subr.mxu0 0.0
    %372 = vmatpush1.xpose.msra.mxu0 0.0
    %373 = vmatprep.mubr.f32.mxu0 %v162
    %374 = vmatmul.mubr.f32.gmra.mrb[0].mxu0 %v158
    %v375 = vpop.f32.mrb[0].mxu0
    %v376 = vadd.f32 %v306, %v375
    %v377 = vpop.f32.mrb[0].mxu0
    %378 = vdwg.mxu0
    %379 = vst [vmem:[#allocation6] sm:$0x1] %v376
    // Predicated region
    $region18: #{tpu_custom_call.1} parent=1 // pred_check
      _
    $region19: #{tpu_custom_call.1} parent=1 // pred_check_branch
      %381 = sbr.rel (0) target = $region21
    $region20: #{tpu_custom_call.1} parent=1 // pred_region
      %s383 = ssub.s32 16, 16
      %384 = vsyncadd [#allocation5], %s383
      %s386 = sshll.u32 [#allocation6], 4
      %s387 = int_to_ptr.vmem [resolvable:$true] %s386
      %389 = dma.vmem_to_hbm [thread:$0]  %s387, 16, %s3, [#allocation5]
    $region21: #{tpu_custom_call.1} parent=1 // pred_fallthru
      _
    // Predicated region
    $region22: #{tpu_custom_call.1} parent=1 // pred_check
      _
    $region23: #{tpu_custom_call.1} parent=1 // pred_check_branch
      %391 = sbr.rel (0) target = $region25
    $region24: #{tpu_custom_call.1} parent=1 // pred_region
      %392 = dma.done [#allocation5], 16
    $region25: #{tpu_custom_call.1} parent=1 // pred_fallthru
      _
    %393 = vsyncpa [#allocation4], 1
    %394 = vsyncpa [#allocation5], 1

</llo_original>
